<compile_context>
chip_gen: v6e
topology: v6e:2x2x1
jax: 0.10.0
libtpu: 0.0.40
codegen_flags: <defaults>
</compile_context>

<pallas_src>
import functools

import jax
import jax.numpy as jnp
from jax.experimental import pallas as pl
from jax.experimental.pallas import tpu as pltpu


def _round_up(x, m):
    return ((x + m - 1) // m) * m


def _choose_block_rows(n, d, k, itemsize, vmem_budget=24 * 1024 * 1024):
    """Pick TM from a VMEM budget; prefer MXU-friendly multiples of 256."""
    acc_bytes = (d * d + 2 * d * k + 2 * 8 * 128) * 4       # resident accumulators
    per_row = 2 * (2 * d + k) * itemsize                    # double-buffered inputs
    avail = max(vmem_budget - acc_bytes, per_row * 8)
    tm = int(avail // per_row)
    tm = max(8, min(tm, 2048))
    if tm >= 256:
        tm = (tm // 256) * 256
    elif tm >= 128:
        tm = (tm // 128) * 128
    else:
        tm = (tm // 8) * 8
    tm = min(tm, _round_up(max(n, 1), 8))
    return max(8, (tm // 8) * 8)


def _make_kernel(tm, d, k, n, needs_mask, num_blocks):
    """Build the per-block kernel (all sizes static / closed over)."""

    def kernel(zq1_ref, zq2_ref, q_ref, s_ref, c_acc, m1_acc, m2_acc, sc_acc):
        i = pl.program_id(0)

        @pl.when(i == 0)
        def _init():
            c_acc[...] = jnp.zeros_like(c_acc)
            m1_acc[...] = jnp.zeros_like(m1_acc)
            m2_acc[...] = jnp.zeros_like(m2_acc)
            sc_acc[...] = jnp.zeros_like(sc_acc)

        # Native-dtype operands straight into the MXU; f32 accumulation.
        zq1 = zq1_ref[...]          # (TM, D)
        zq2 = zq2_ref[...]          # (TM, D)
        q = q_ref[...]              # (TM, K)

        if needs_mask:
            # Ragged tail: rows >= n are unspecified (no wrapper padding).
            row = jax.lax.broadcasted_iota(jnp.int32, (tm, 1), 0)
            valid = (i * tm + row) < n
            zq1 = jnp.where(valid, zq1, jnp.zeros_like(zq1))
            zq2 = jnp.where(valid, zq2, jnp.zeros_like(zq2))
            q = jnp.where(valid, q, jnp.zeros_like(q))

        dn = (((0,), (0,)), ((), ()))   # contract the row (batch) dim: A^T B
        c_acc[...] += (
            jax.lax.dot_general(zq1, zq1, dn, preferred_element_type=jnp.float32)
            + jax.lax.dot_general(zq2, zq2, dn, preferred_element_type=jnp.float32))
        m1_acc[...] += jax.lax.dot_general(zq1, q, dn,
                                           preferred_element_type=jnp.float32)
        m2_acc[...] += jax.lax.dot_general(zq2, q, dn,
                                           preferred_element_type=jnp.float32)

        # Diagonal corrections (replace the "1 - eye" masks) + trace: O(TM*D).
        # f32 accumulation without materializing f32 copies of the tiles.
        d11 = jnp.sum(zq1 * zq1, axis=1, keepdims=True, dtype=jnp.float32)
        d22 = jnp.sum(zq2 * zq2, axis=1, keepdims=True, dtype=jnp.float32)
        d12 = jnp.sum(zq1 * zq2, axis=1, keepdims=True, dtype=jnp.float32)
        dq = jnp.sum(q * q, axis=1, keepdims=True, dtype=jnp.float32)

        p_trace = jnp.sum(d12)                        # partial trace(zq1 zq2^T)
        p_l2_diag = jnp.sum((d11 + d12 + d22) * dq)   # diag part of the 3 l2 sums
        p_l3_diag = jnp.sum(d11 * d11 + d22 * d22)    # diag part of sum(zaxza^2)

        rowi = jax.lax.broadcasted_iota(jnp.int32, (8, 128), 0)
        upd = jnp.where(rowi == 0, p_trace,
                        jnp.where(rowi == 1, p_l2_diag,
                                  jnp.where(rowi == 2, p_l3_diag, 0.0)))
        sc_acc[...] += upd

        @pl.when(i == num_blocks - 1)
        def _finalize():
            c = c_acc[...]          # zq1^T zq1 + zq2^T zq2   (D, D)
            m1 = m1_acc[...]        # zq1^T q                 (D, K)
            m2 = m2_acc[...]        # zq2^T q                 (D, K)
            l2_full = jnp.sum(m1 * m1) + jnp.sum(m2 * m2) + jnp.sum(m1 * m2)
            l3_full = jnp.sum(c * c)
            # row 0: trace12 ; row 1: l2_full - l2_diag ; row 2: l3_full - l3_diag
            add = jnp.where(rowi == 1, l2_full,
                            jnp.where(rowi == 2, l3_full, 0.0))
            sign = jnp.where(rowi == 0, 1.0, -1.0)
            s_ref[...] = add + sign * sc_acc[...]

    return kernel


def weak_spectral_loss(zq1, zq2, q, *, alpha, beta, lam_consist,
                       block_rows=None):
    """Pallas TPU implementation of WeakSpectralLoss.forward (z1=None path)."""
    assert zq1.shape == zq2.shape and zq1.shape[0] == q.shape[0]
    n, d = zq1.shape
    k = q.shape[1]
    itemsize = zq1.dtype.itemsize

    if block_rows is None:
        tm = _choose_block_rows(n, d, k, itemsize)
    else:
        tm = max(8, (int(block_rows) // 8) * 8)
        tm = min(tm, _round_up(max(n, 1), 8))
    num_blocks = max(1, (n + tm - 1) // tm)
    needs_mask = (n % tm) != 0

    flops = 4 * n * d * (d + k) + 2 * (d * d + 2 * d * k)
    bytes_accessed = (2 * n * d + n * k) * itemsize + 8 * 128 * 4

    acc_bytes = (d * d + 2 * d * k + 2 * 8 * 128) * 4
    in_bytes = 2 * (2 * d + k) * tm * itemsize
    vmem_limit = max(32 * 1024 * 1024, int((acc_bytes + in_bytes + (1 << 20)) * 1.25))

    kernel = _make_kernel(tm, d, k, n, needs_mask, num_blocks)

    s_tile = pl.pallas_call(
        kernel,
        grid=(num_blocks,),
        in_specs=[
            pl.BlockSpec((tm, d), lambda i: (i, 0)),
            pl.BlockSpec((tm, d), lambda i: (i, 0)),
            pl.BlockSpec((tm, k), lambda i: (i, 0)),
        ],
        out_specs=pl.BlockSpec((8, 128), lambda i: (0, 0)),
        out_shape=jax.ShapeDtypeStruct((8, 128), jnp.float32),
        scratch_shapes=[
            pltpu.VMEM((d, d), jnp.float32),     # c accumulator
            pltpu.VMEM((d, k), jnp.float32),     # m1 accumulator
            pltpu.VMEM((d, k), jnp.float32),     # m2 accumulator
            pltpu.VMEM((8, 128), jnp.float32),   # scalar partial accumulator
        ],
        compiler_params=pltpu.CompilerParams(
            dimension_semantics=("arbitrary",),
            vmem_limit_bytes=vmem_limit),
        cost_estimate=pl.CostEstimate(
            flops=flops, transcendentals=0, bytes_accessed=bytes_accessed),
    )(zq1, zq2, q)

    # O(1) scalar finalization in the wrapper.
    trace12 = s_tile[0, 0]
    l2_off = s_tile[1, 0]
    l3_off = s_tile[2, 0]

    n_f = jnp.float32(n)
    l1 = (-2.0 * alpha) * trace12 / n_f
    # NOTE: n*(n-1) == 0 for n == 1 (same division-by-zero as the PyTorch code).
    l2 = (-2.0 * beta) * l2_off / (3.0 * n_f * (n_f - 1.0))
    coef = float(alpha) + float(beta) / float(k)
    l3 = (float(lam_consist) * coef * coef) * l3_off / (2.0 * n_f * (2.0 * n_f - 1.0))

    loss = l1 + l2 + l3
    return loss, l1, l2


def _reference(zq1, zq2, q, alpha, beta, lam_consist):
    """Pure-JAX mirror of the PyTorch forward (z1 is None branch)."""
    hp = jax.lax.Precision.HIGHEST
    zq1 = zq1.astype(jnp.float32)
    zq2 = zq2.astype(jnp.float32)
    q = q.astype(jnp.float32)
    n = zq1.shape[0]
    k = q.shape[1]
    Q = jnp.matmul(q, q.T, precision=hp)
    anti_zq = 1.0 - jnp.eye(n, dtype=jnp.float32)
    anti_za = 1.0 - jnp.eye(2 * n, dtype=jnp.float32)
    zq1xzq2 = jnp.matmul(zq1, zq2.T, precision=hp)
    zq1xzq1 = jnp.matmul(zq1, zq1.T, precision=hp)
    zq2xzq2 = jnp.matmul(zq2, zq2.T, precision=hp)
    za = jnp.concatenate([zq1, zq2], axis=0)
    zaxza = jnp.matmul(za, za.T, precision=hp)
    l1 = -2.0 * alpha * jnp.trace(zq1xzq2) / n
    den = n * (n - 1)
    l2 = (-2.0 * beta * jnp.sum(zq1xzq2 * Q * anti_zq) / den
          + -2.0 * beta * jnp.sum(zq1xzq1 * Q * anti_zq) / den
          + -2.0 * beta * jnp.sum(zq2xzq2 * Q * anti_zq) / den) / 3.0
    coef = alpha + beta / k
    l3 = lam_consist * coef * coef * jnp.sum((zaxza ** 2) * anti_za) / (2 * n * (2 * n - 1))
    return l1 + l2 + l3, l1, l2


if __name__ == "__main__":
    key = jax.random.PRNGKey(0)
    alpha, beta, lam_consist = 1.0, 0.5, 0.1

    # Case 1: tiny config (single block, no masking).
    k1, k2, k3, k4, k5, k6 = jax.random.split(key, 6)
    N, D, K = 8, 32, 16
    zq1 = jax.random.normal(k1, (N, D), dtype=jnp.float32)
    zq2 = jax.random.normal(k2, (N, D), dtype=jnp.float32)
    q = jax.nn.softmax(jax.random.normal(k3, (N, K), dtype=jnp.float32), axis=-1)

    loss, l1, l2 = weak_spectral_loss(
        zq1, zq2, q, alpha=alpha, beta=beta, lam_consist=lam_consist)
    jax.block_until_ready((loss, l1, l2))
    ref_loss, ref_l1, ref_l2 = _reference(zq1, zq2, q, alpha, beta, lam_consist)
    assert jnp.allclose(loss, ref_loss, rtol=1e-4, atol=1e-4), (loss, ref_loss)
    assert jnp.allclose(l1, ref_l1, rtol=1e-4, atol=1e-4), (l1, ref_l1)
    assert jnp.allclose(l2, ref_l2, rtol=1e-4, atol=1e-4), (l2, ref_l2)

    # Case 2: multi-block grid with ragged last block (in-kernel masking path).
    N2, D2, K2 = 300, 64, 10
    zq1b = jax.random.normal(k4, (N2, D2), dtype=jnp.float32)
    zq2b = jax.random.normal(k5, (N2, D2), dtype=jnp.float32)
    qb = jax.nn.softmax(jax.random.normal(k6, (N2, K2), dtype=jnp.float32), axis=-1)

    loss2, l1b, l2b = weak_spectral_loss(
        zq1b, zq2b, qb, alpha=alpha, beta=beta, lam_consist=lam_consist,
        block_rows=128)
    jax.block_until_ready((loss2, l1b, l2b))
    ref2 = _reference(zq1b, zq2b, qb, alpha, beta, lam_consist)
    assert jnp.allclose(loss2, ref2[0], rtol=1e-4, atol=1e-4), (loss2, ref2[0])
    assert jnp.allclose(l1b, ref2[1], rtol=1e-4, atol=1e-4), (l1b, ref2[1])
    assert jnp.allclose(l2b, ref2[2], rtol=1e-4, atol=1e-4), (l2b, ref2[2])

    # Case 3: auto block_rows selection (single ragged block covering all rows).
    loss3, l1c, l2c = weak_spectral_loss(
        zq1b, zq2b, qb, alpha=alpha, beta=beta, lam_consist=lam_consist)
    jax.block_until_ready((loss3, l1c, l2c))
    assert jnp.allclose(loss3, ref2[0], rtol=1e-4, atol=1e-4), (loss3, ref2[0])
    assert jnp.allclose(l1c, ref2[1], rtol=1e-4, atol=1e-4), (l1c, ref2[1])
    assert jnp.allclose(l2c, ref2[2], rtol=1e-4, atol=1e-4), (l2c, ref2[2])

    print("KERNEL_OK")
</pallas_src>

<mosaic_0001>
module attributes {stable_mosaic.version = 11 : i64} {
  func.func @kernel(%arg0: i32, %arg1: memref<8x32xf32, #tpu.memory_space<vmem>>, %arg2: memref<8x32xf32, #tpu.memory_space<vmem>>, %arg3: memref<8x16xf32, #tpu.memory_space<vmem>>, %arg4: memref<8x128xf32, #tpu.memory_space<vmem>>, %arg5: memref<32x32xf32, #tpu.memory_space<vmem>>, %arg6: memref<32x16xf32, #tpu.memory_space<vmem>>, %arg7: memref<32x16xf32, #tpu.memory_space<vmem>>, %arg8: memref<8x128xf32, #tpu.memory_space<vmem>>) attributes {dimension_semantics = [#tpu.dimension_semantics<arbitrary>], iteration_bounds = array<i64: 1>, scalar_prefetch = 0 : i64, scratch_operands = 4 : i64, tpu.core_type = #tpu.core_type<tc>, window_params = [{transform_indices = @transform_0, window_bounds = array<i64: 8, 32>}, {transform_indices = @transform_1, window_bounds = array<i64: 8, 32>}, {transform_indices = @transform_2, window_bounds = array<i64: 8, 16>}, {pipeline_mode = #tpu.pipeline_mode<synchronous>, transform_indices = @transform_3, window_bounds = array<i64: 8, 128>}]} {
    %c0_i32 = arith.constant 0 : i32
    %0 = arith.cmpi eq, %arg0, %c0_i32 : i32
    %1 = arith.extui %0 : i1 to i32
    %c0_i32_0 = arith.constant 0 : i32
    %2 = arith.cmpi ne, %1, %c0_i32_0 : i32
    scf.if %2 {
      %cst_36 = arith.constant 0.000000e+00 : f32
      %70 = vector.broadcast %cst_36 : f32 to vector<32x32xf32>
      %c0_37 = arith.constant 0 : index
      %c0_38 = arith.constant 0 : index
      %71 = vector.load %arg5[%c0_37, %c0_38] : memref<32x32xf32, #tpu.memory_space<vmem>>, vector<32x32xf32>
      tpu.vector_store %arg5[%c0_37, %c0_38], %70 {strides = array<i32>} : memref<32x32xf32, #tpu.memory_space<vmem>>, vector<32x32xf32>,
      %cst_39 = arith.constant 0.000000e+00 : f32
      %72 = vector.broadcast %cst_39 : f32 to vector<32x16xf32>
      %c0_40 = arith.constant 0 : index
      %c0_41 = arith.constant 0 : index
      %73 = vector.load %arg6[%c0_40, %c0_41] : memref<32x16xf32, #tpu.memory_space<vmem>>, vector<32x16xf32>
      tpu.vector_store %arg6[%c0_40, %c0_41], %72 {strides = array<i32>} : memref<32x16xf32, #tpu.memory_space<vmem>>, vector<32x16xf32>,
      %cst_42 = arith.constant 0.000000e+00 : f32
      %74 = vector.broadcast %cst_42 : f32 to vector<32x16xf32>
      %c0_43 = arith.constant 0 : index
      %c0_44 = arith.constant 0 : index
      %75 = vector.load %arg7[%c0_43, %c0_44] : memref<32x16xf32, #tpu.memory_space<vmem>>, vector<32x16xf32>
      tpu.vector_store %arg7[%c0_43, %c0_44], %74 {strides = array<i32>} : memref<32x16xf32, #tpu.memory_space<vmem>>, vector<32x16xf32>,
      %cst_45 = arith.constant 0.000000e+00 : f32
      %76 = vector.broadcast %cst_45 : f32 to vector<8x128xf32>
      %c0_46 = arith.constant 0 : index
      %c0_47 = arith.constant 0 : index
      %77 = vector.load %arg8[%c0_46, %c0_47] : memref<8x128xf32, #tpu.memory_space<vmem>>, vector<8x128xf32>
      tpu.vector_store %arg8[%c0_46, %c0_47], %76 {strides = array<i32>} : memref<8x128xf32, #tpu.memory_space<vmem>>, vector<8x128xf32>,
    } else {
    }
    %c0 = arith.constant 0 : index
    %c0_1 = arith.constant 0 : index
    %3 = vector.load %arg1[%c0, %c0_1] : memref<8x32xf32, #tpu.memory_space<vmem>>, vector<8x32xf32>
    %c0_2 = arith.constant 0 : index
    %c0_3 = arith.constant 0 : index
    %4 = vector.load %arg2[%c0_2, %c0_3] : memref<8x32xf32, #tpu.memory_space<vmem>>, vector<8x32xf32>
    %c0_4 = arith.constant 0 : index
    %c0_5 = arith.constant 0 : index
    %5 = vector.load %arg3[%c0_4, %c0_5] : memref<8x16xf32, #tpu.memory_space<vmem>>, vector<8x16xf32>
    %c0_6 = arith.constant 0 : index
    %c0_7 = arith.constant 0 : index
    %6 = vector.load %arg5[%c0_6, %c0_7] : memref<32x32xf32, #tpu.memory_space<vmem>>, vector<32x32xf32>
    %cst = arith.constant dense<0.000000e+00> : vector<32x32xf32>
    %7 = tpu.matmul %3, %3, %cst {dimension_numbers = #tpu.dot_dimension_numbers<[0], [0], [1], [1], [0, 1, 1, 1], [], []>} : vector<8x32xf32>, vector<8x32xf32>, vector<32x32xf32> -> vector<32x32xf32>
    %cst_8 = arith.constant dense<0.000000e+00> : vector<32x32xf32>
    %8 = tpu.matmul %4, %4, %cst_8 {dimension_numbers = #tpu.dot_dimension_numbers<[0], [0], [1], [1], [0, 1, 1, 1], [], []>} : vector<8x32xf32>, vector<8x32xf32>, vector<32x32xf32> -> vector<32x32xf32>
    %9 = arith.addf %7, %8 : vector<32x32xf32>
    %10 = arith.addf %6, %9 : vector<32x32xf32>
    %c0_9 = arith.constant 0 : index
    %c0_10 = arith.constant 0 : index
    %11 = vector.load %arg5[%c0_9, %c0_10] : memref<32x32xf32, #tpu.memory_space<vmem>>, vector<32x32xf32>
    tpu.vector_store %arg5[%c0_9, %c0_10], %10 {strides = array<i32>} : memref<32x32xf32, #tpu.memory_space<vmem>>, vector<32x32xf32>,
    %c0_11 = arith.constant 0 : index
    %c0_12 = arith.constant 0 : index
    %12 = vector.load %arg6[%c0_11, %c0_12] : memref<32x16xf32, #tpu.memory_space<vmem>>, vector<32x16xf32>
    %cst_13 = arith.constant dense<0.000000e+00> : vector<32x16xf32>
    %13 = tpu.matmul %3, %5, %cst_13 {dimension_numbers = #tpu.dot_dimension_numbers<[0], [0], [1], [1], [0, 1, 1, 1], [], []>} : vector<8x32xf32>, vector<8x16xf32>, vector<32x16xf32> -> vector<32x16xf32>
    %14 = arith.addf %12, %13 : vector<32x16xf32>
    %c0_14 = arith.constant 0 : index
    %c0_15 = arith.constant 0 : index
    %15 = vector.load %arg6[%c0_14, %c0_15] : memref<32x16xf32, #tpu.memory_space<vmem>>, vector<32x16xf32>
    tpu.vector_store %arg6[%c0_14, %c0_15], %14 {strides = array<i32>} : memref<32x16xf32, #tpu.memory_space<vmem>>, vector<32x16xf32>,
    %c0_16 = arith.constant 0 : index
    %c0_17 = arith.constant 0 : index
    %16 = vector.load %arg7[%c0_16, %c0_17] : memref<32x16xf32, #tpu.memory_space<vmem>>, vector<32x16xf32>
    %cst_18 = arith.constant dense<0.000000e+00> : vector<32x16xf32>
    %17 = tpu.matmul %4, %5, %cst_18 {dimension_numbers = #tpu.dot_dimension_numbers<[0], [0], [1], [1], [0, 1, 1, 1], [], []>} : vector<8x32xf32>, vector<8x16xf32>, vector<32x16xf32> -> vector<32x16xf32>
    %18 = arith.addf %16, %17 : vector<32x16xf32>
    %c0_19 = arith.constant 0 : index
    %c0_20 = arith.constant 0 : index
    %19 = vector.load %arg7[%c0_19, %c0_20] : memref<32x16xf32, #tpu.memory_space<vmem>>, vector<32x16xf32>
    tpu.vector_store %arg7[%c0_19, %c0_20], %18 {strides = array<i32>} : memref<32x16xf32, #tpu.memory_space<vmem>>, vector<32x16xf32>,
    %20 = arith.mulf %3, %3 : vector<8x32xf32>
    %cst_21 = arith.constant dense<0.000000e+00> : vector<8xf32>
    %21 = vector.multi_reduction <add>, %20, %cst_21 [1] : vector<8x32xf32> to vector<8xf32>
    %22 = vector.shape_cast %21 : vector<8xf32> to vector<8x1xf32>
    %23 = arith.mulf %4, %4 : vector<8x32xf32>
    %cst_22 = arith.constant dense<0.000000e+00> : vector<8xf32>
    %24 = vector.multi_reduction <add>, %23, %cst_22 [1] : vector<8x32xf32> to vector<8xf32>
    %25 = vector.shape_cast %24 : vector<8xf32> to vector<8x1xf32>
    %26 = arith.mulf %3, %4 : vector<8x32xf32>
    %cst_23 = arith.constant dense<0.000000e+00> : vector<8xf32>
    %27 = vector.multi_reduction <add>, %26, %cst_23 [1] : vector<8x32xf32> to vector<8xf32>
    %28 = vector.shape_cast %27 : vector<8xf32> to vector<8x1xf32>
    %29 = arith.mulf %5, %5 : vector<8x16xf32>
    %cst_24 = arith.constant dense<0.000000e+00> : vector<8xf32>
    %30 = vector.multi_reduction <add>, %29, %cst_24 [1] : vector<8x16xf32> to vector<8xf32>
    %31 = vector.shape_cast %30 : vector<8xf32> to vector<8x1xf32>
    %32 = vector.shape_cast %28 : vector<8x1xf32> to vector<1x8x1xf32>
    %cst_25 = arith.constant dense<0.000000e+00> : vector<1xf32>
    %33 = vector.multi_reduction <add>, %32, %cst_25 [1, 2] : vector<1x8x1xf32> to vector<1xf32>
    %34 = vector.shape_cast %33 : vector<1xf32> to vector<1x1x1xf32>
    %35 = vector.extract %34[0, 0, 0] : f32 from vector<1x1x1xf32>
    %36 = arith.addf %22, %28 : vector<8x1xf32>
    %37 = arith.addf %36, %25 : vector<8x1xf32>
    %38 = arith.mulf %37, %31 : vector<8x1xf32>
    %39 = vector.shape_cast %38 : vector<8x1xf32> to vector<1x8x1xf32>
    %cst_26 = arith.constant dense<0.000000e+00> : vector<1xf32>
    %40 = vector.multi_reduction <add>, %39, %cst_26 [1, 2] : vector<1x8x1xf32> to vector<1xf32>
    %41 = vector.shape_cast %40 : vector<1xf32> to vector<1x1x1xf32>
    %42 = vector.extract %41[0, 0, 0] : f32 from vector<1x1x1xf32>
    %43 = arith.mulf %22, %22 : vector<8x1xf32>
    %44 = arith.mulf %25, %25 : vector<8x1xf32>
    %45 = arith.addf %43, %44 : vector<8x1xf32>
    %46 = vector.shape_cast %45 : vector<8x1xf32> to vector<1x8x1xf32>
    %cst_27 = arith.constant dense<0.000000e+00> : vector<1xf32>
    %47 = vector.multi_reduction <add>, %46, %cst_27 [1, 2] : vector<1x8x1xf32> to vector<1xf32>
    %48 = vector.shape_cast %47 : vector<1xf32> to vector<1x1x1xf32>
    %49 = vector.extract %48[0, 0, 0] : f32 from vector<1x1x1xf32>
    %50 = tpu.iota {dimensions = array<i32: 0>} : vector<8x128xi32>
    %c0_i32_28 = arith.constant 0 : i32
    %51 = vector.broadcast %c0_i32_28 : i32 to vector<8x128xi32>
    %52 = arith.cmpi eq, %50, %51 : vector<8x128xi32>
    %c1_i32 = arith.constant 1 : i32
    %53 = vector.broadcast %c1_i32 : i32 to vector<8x128xi32>
    %54 = arith.cmpi eq, %50, %53 : vector<8x128xi32>
    %c2_i32 = arith.constant 2 : i32
    %55 = vector.broadcast %c2_i32 : i32 to vector<8x128xi32>
    %56 = arith.cmpi eq, %50, %55 : vector<8x128xi32>
    %cst_29 = arith.constant 0.000000e+00 : f32
    %57 = vector.broadcast %49 : f32 to vector<8x128xf32>
    %58 = vector.broadcast %cst_29 : f32 to vector<8x128xf32>
    %59 = arith.select %56, %57, %58 : vector<8x128xi1>, vector<8x128xf32>
    %60 = vector.broadcast %42 : f32 to vector<8x128xf32>
    %61 = arith.select %54, %60, %59 : vector<8x128xi1>, vector<8x128xf32>
    %62 = vector.broadcast %35 : f32 to vector<8x128xf32>
    %63 = arith.select %52, %62, %61 : vector<8x128xi1>, vector<8x128xf32>
    %c0_30 = arith.constant 0 : index
    %c0_31 = arith.constant 0 : index
    %64 = vector.load %arg8[%c0_30, %c0_31] : memref<8x128xf32, #tpu.memory_space<vmem>>, vector<8x128xf32>
    %65 = arith.addf %64, %63 : vector<8x128xf32>
    %c0_32 = arith.constant 0 : index
    %c0_33 = arith.constant 0 : index
    %66 = vector.load %arg8[%c0_32, %c0_33] : memref<8x128xf32, #tpu.memory_space<vmem>>, vector<8x128xf32>
    tpu.vector_store %arg8[%c0_32, %c0_33], %65 {strides = array<i32>} : memref<8x128xf32, #tpu.memory_space<vmem>>, vector<8x128xf32>,
    %c0_i32_34 = arith.constant 0 : i32
    %67 = arith.cmpi eq, %arg0, %c0_i32_34 : i32
    %68 = arith.extui %67 : i1 to i32
    %c0_i32_35 = arith.constant 0 : i32
    %69 = arith.cmpi ne, %68, %c0_i32_35 : i32
    scf.if %69 {
      %c0_36 = arith.constant 0 : index
      %c0_37 = arith.constant 0 : index
      %70 = vector.load %arg5[%c0_36, %c0_37] : memref<32x32xf32, #tpu.memory_space<vmem>>, vector<32x32xf32>
      %c0_38 = arith.constant 0 : index
      %c0_39 = arith.constant 0 : index
      %71 = vector.load %arg6[%c0_38, %c0_39] : memref<32x16xf32, #tpu.memory_space<vmem>>, vector<32x16xf32>
      %c0_40 = arith.constant 0 : index
      %c0_41 = arith.constant 0 : index
      %72 = vector.load %arg7[%c0_40, %c0_41] : memref<32x16xf32, #tpu.memory_space<vmem>>, vector<32x16xf32>
      %73 = arith.mulf %71, %71 : vector<32x16xf32>
      %74 = vector.shape_cast %73 : vector<32x16xf32> to vector<1x32x16xf32>
      %cst_42 = arith.constant dense<0.000000e+00> : vector<1xf32>
      %75 = vector.multi_reduction <add>, %74, %cst_42 [1, 2] : vector<1x32x16xf32> to vector<1xf32>
      %76 = vector.shape_cast %75 : vector<1xf32> to vector<1x1x1xf32>
      %77 = vector.extract %76[0, 0, 0] : f32 from vector<1x1x1xf32>
      %78 = arith.mulf %72, %72 : vector<32x16xf32>
      %79 = vector.shape_cast %78 : vector<32x16xf32> to vector<1x32x16xf32>
      %cst_43 = arith.constant dense<0.000000e+00> : vector<1xf32>
      %80 = vector.multi_reduction <add>, %79, %cst_43 [1, 2] : vector<1x32x16xf32> to vector<1xf32>
      %81 = vector.shape_cast %80 : vector<1xf32> to vector<1x1x1xf32>
      %82 = vector.extract %81[0, 0, 0] : f32 from vector<1x1x1xf32>
      %83 = arith.addf %77, %82 : f32
      %84 = arith.mulf %71, %72 : vector<32x16xf32>
      %85 = vector.shape_cast %84 : vector<32x16xf32> to vector<1x32x16xf32>
      %cst_44 = arith.constant dense<0.000000e+00> : vector<1xf32>
      %86 = vector.multi_reduction <add>, %85, %cst_44 [1, 2] : vector<1x32x16xf32> to vector<1xf32>
      %87 = vector.shape_cast %86 : vector<1xf32> to vector<1x1x1xf32>
      %88 = vector.extract %87[0, 0, 0] : f32 from vector<1x1x1xf32>
      %89 = arith.addf %83, %88 : f32
      %90 = arith.mulf %70, %70 : vector<32x32xf32>
      %91 = vector.shape_cast %90 : vector<32x32xf32> to vector<1x32x32xf32>
      %cst_45 = arith.constant dense<0.000000e+00> : vector<1xf32>
      %92 = vector.multi_reduction <add>, %91, %cst_45 [1, 2] : vector<1x32x32xf32> to vector<1xf32>
      %93 = vector.shape_cast %92 : vector<1xf32> to vector<1x1x1xf32>
      %94 = vector.extract %93[0, 0, 0] : f32 from vector<1x1x1xf32>
      %c1_i32_46 = arith.constant 1 : i32
      %95 = vector.broadcast %c1_i32_46 : i32 to vector<8x128xi32>
      %96 = arith.cmpi eq, %50, %95 : vector<8x128xi32>
      %c2_i32_47 = arith.constant 2 : i32
      %97 = vector.broadcast %c2_i32_47 : i32 to vector<8x128xi32>
      %98 = arith.cmpi eq, %50, %97 : vector<8x128xi32>
      %cst_48 = arith.constant 0.000000e+00 : f32
      %99 = vector.broadcast %94 : f32 to vector<8x128xf32>
      %100 = vector.broadcast %cst_48 : f32 to vector<8x128xf32>
      %101 = arith.select %98, %99, %100 : vector<8x128xi1>, vector<8x128xf32>
      %102 = vector.broadcast %89 : f32 to vector<8x128xf32>
      %103 = arith.select %96, %102, %101 : vector<8x128xi1>, vector<8x128xf32>
      %c0_i32_49 = arith.constant 0 : i32
      %104 = vector.broadcast %c0_i32_49 : i32 to vector<8x128xi32>
      %105 = arith.cmpi eq, %50, %104 : vector<8x128xi32>
      %cst_50 = arith.constant 1.000000e+00 : f32
      %cst_51 = arith.constant -1.000000e+00 : f32
      %106 = vector.broadcast %cst_50 : f32 to vector<8x128xf32>
      %107 = vector.broadcast %cst_51 : f32 to vector<8x128xf32>
      %108 = arith.select %105, %106, %107 : vector<8x128xi1>, vector<8x128xf32>
      %c0_52 = arith.constant 0 : index
      %c0_53 = arith.constant 0 : index
      %109 = vector.load %arg8[%c0_52, %c0_53] : memref<8x128xf32, #tpu.memory_space<vmem>>, vector<8x128xf32>
      %110 = arith.mulf %108, %109 : vector<8x128xf32>
      %111 = arith.addf %103, %110 : vector<8x128xf32>
      %c0_54 = arith.constant 0 : index
      %c0_55 = arith.constant 0 : index
      %112 = vector.load %arg4[%c0_54, %c0_55] : memref<8x128xf32, #tpu.memory_space<vmem>>, vector<8x128xf32>
      tpu.vector_store %arg4[%c0_54, %c0_55], %111 {strides = array<i32>} : memref<8x128xf32, #tpu.memory_space<vmem>>, vector<8x128xf32>,
    } else {
    }
    return
  }
  func.func @transform_0(%arg0: i32) -> (i32, i32) {
    %c0_i32 = arith.constant 0 : i32
    %c0_i32_0 = arith.constant 0 : i32
    return %arg0, %c0_i32 : i32, i32
  }
  func.func @transform_1(%arg0: i32) -> (i32, i32) {
    %c0_i32 = arith.constant 0 : i32
    %c0_i32_0 = arith.constant 0 : i32
    return %arg0, %c0_i32 : i32, i32
  }
  func.func @transform_2(%arg0: i32) -> (i32, i32) {
    %c0_i32 = arith.constant 0 : i32
    %c0_i32_0 = arith.constant 0 : i32
    return %arg0, %c0_i32 : i32, i32
  }
  func.func @transform_3(%arg0: i32) -> (i32, i32) {
    %c0_i32 = arith.constant 0 : i32
    %c0_i32_0 = arith.constant 0 : i32
    %c0_i32_1 = arith.constant 0 : i32
    return %c0_i32, %c0_i32_0 : i32, i32
  }
}

</mosaic_0001>

<llo_original>
// kernel: tpu_custom_call.1
$region0: #{tpu_custom_call.1}
  #allocation0 [shape = 'u32[]', space=smem, size = 0x4, offset = 0x4, fixed_abs, tag = 'smem constant byte address 0x4 - core index']
  #allocation1 [shape = 'u32[144,128]{1,0:T(1,128)}', space=vmem, size = 0x12000, scoped, tag = 'internal scratch']
  #allocation2 [shape = 'f32[32,32]{1,0:T(8,128)}', space=vmem, size = 0x4000, scoped, tag = 'scratch operand']
  #allocation3 [shape = 'f32[32,16]{1,0:T(8,128)}', space=vmem, size = 0x4000, scoped, tag = 'scratch operand']
  #allocation4 [shape = 'f32[32,16]{1,0:T(8,128)}', space=vmem, size = 0x4000, scoped, tag = 'scratch operand']
  #allocation5 [shape = 'f32[8,128]{1,0:T(8,128)}', space=vmem, size = 0x1000, scoped, tag = 'scratch operand']
  %s0 = inlined_call_operand.hbm [shape: f32[8,32], index: 0, kind: input, shape index: {}]
  %s1 = inlined_call_operand.hbm [shape: f32[8,32], index: 1, kind: input, shape index: {}]
  %s2 = inlined_call_operand.hbm [shape: f32[8,16], index: 2, kind: input, shape index: {}]
  %s3 = inlined_call_operand.hbm [shape: f32[8,128], index: 3, kind: output, shape index: {}]
  %s4 = sld [smem:[#allocation0]]
  $region42: #{tpu_custom_call.1} parent=0
    _
  %s6 = ssub.s32 1, %s4
  %s7 = scalar_select 0, %s6, %s4
  $region1: #{tpu_custom_call.1} parent=0
    #allocation6 [shape = 'u8[4096]{0}', space=vmem, size = 0x1000, scoped, tag = 'input window, operand 0, single buffered']
    #allocation7 [shape = 's32[1]{0}', space=sflag, size = 0x4, scoped, tag = 'scoped memory for tpu_custom_call.1']
    #allocation8 [shape = 's32[1]{0}', space=sflag, size = 0x4, scoped, tag = 'scoped memory for tpu_custom_call.1']
    #allocation9 [shape = 'u8[4096]{0}', space=vmem, size = 0x1000, scoped, tag = 'input window, operand 1, single buffered']
    #allocation10 [shape = 's32[1]{0}', space=sflag, size = 0x4, scoped, tag = 'scoped memory for tpu_custom_call.1']
    #allocation11 [shape = 'u8[4096]{0}', space=vmem, size = 0x1000, scoped, tag = 'input window, operand 2, single buffered']
    #allocation12 [shape = 'u8[4096]{0}', space=vmem, size = 0x1000, scoped, tag = 'output window, operand 0, single buffered']
    %8 = vsyncpa [#allocation7], 0
    %9 = vsyncpa [#allocation10], 0
    %10 = vsyncpa [#allocation8], 0
    // Predicated region
    $region2: #{tpu_custom_call.1} parent=1 // pred_check
      _
    $region3: #{tpu_custom_call.1} parent=1 // pred_check_branch
      %12 = sbr.rel (0) target = $region5
    $region4: #{tpu_custom_call.1} parent=1 // pred_region
      %s14 = ssub.s32 128, 128
      %15 = vsyncadd [#allocation7], %s14
      %s17 = sshll.u32 [#allocation6], 4
      %s18 = int_to_ptr.vmem [resolvable:$true] %s17
      %20 = dma.hbm_to_vmem [thread:$0]  %s0, 128, %s18, [#allocation7]
    $region5: #{tpu_custom_call.1} parent=1 // pred_fallthru
      _
    // Predicated region
    $region6: #{tpu_custom_call.1} parent=1 // pred_check
      _
    $region7: #{tpu_custom_call.1} parent=1 // pred_check_branch
      %22 = sbr.rel (0) target = $region9
    $region8: #{tpu_custom_call.1} parent=1 // pred_region
      %s24 = ssub.s32 128, 128
      %25 = vsyncadd [#allocation10], %s24
      %s27 = sshll.u32 [#allocation9], 4
      %s28 = int_to_ptr.vmem [resolvable:$true] %s27
      %30 = dma.hbm_to_vmem [thread:$0]  %s1, 128, %s28, [#allocation10]
    $region9: #{tpu_custom_call.1} parent=1 // pred_fallthru
      _
    // Predicated region
    $region10: #{tpu_custom_call.1} parent=1 // pred_check
      _
    $region11: #{tpu_custom_call.1} parent=1 // pred_check_branch
      %32 = sbr.rel (0) target = $region13
    $region12: #{tpu_custom_call.1} parent=1 // pred_region
      %s34 = ssub.s32 128, 128
      %35 = vsyncadd [#allocation10], %s34
      %s37 = sshll.u32 [#allocation11], 4
      %s38 = int_to_ptr.vmem [resolvable:$true] %s37
      %40 = dma.hbm_to_vmem [thread:$0]  %s2, 128, %s38, [#allocation10]
    $region13: #{tpu_custom_call.1} parent=1 // pred_fallthru
      _
    // Predicated region
    $region14: #{tpu_custom_call.1} parent=1 // pred_check
      _
    $region15: #{tpu_custom_call.1} parent=1 // pred_check_branch
      %42 = sbr.rel (0) target = $region17
    $region16: #{tpu_custom_call.1} parent=1 // pred_region
      %43 = dma.done [#allocation7], 128
    $region17: #{tpu_custom_call.1} parent=1 // pred_fallthru
      _
    // Predicated region
    $region18: #{tpu_custom_call.1} parent=1 // pred_check
      _
    $region19: #{tpu_custom_call.1} parent=1 // pred_check_branch
      %45 = sbr.rel (0) target = $region21
    $region20: #{tpu_custom_call.1} parent=1 // pred_region
      %46 = dma.done [#allocation10], 128
    $region21: #{tpu_custom_call.1} parent=1 // pred_fallthru
      _
    // Predicated region
    $region22: #{tpu_custom_call.1} parent=1 // pred_check
      _
    $region23: #{tpu_custom_call.1} parent=1 // pred_check_branch
      %48 = sbr.rel (0) target = $region25
    $region24: #{tpu_custom_call.1} parent=1 // pred_region
      %49 = dma.done [#allocation10], 128
    $region25: #{tpu_custom_call.1} parent=1 // pred_fallthru
      _
    %p50 = scmp.eq.s32.totalorder 0, 0
    // Predicated region
    $region26: #{tpu_custom_call.1} parent=1 // pred_check
      %p51 = pneg %p50
    $region27: #{tpu_custom_call.1} parent=1 // pred_check_branch
      %53 = sbr.rel (%p51) target = $region29
    $region28: #{tpu_custom_call.1} parent=1 // pred_region
      %vm54 = vcmask 261120
      %55 = vst.msk [vmem:[#allocation2] sm:$0xff] %vm54, 0.0
      %56 = vst.msk [vmem:[#allocation2 + $0x8] sm:$0xff] %vm54, 0.0
      %57 = vst.msk [vmem:[#allocation2 + $0x10] sm:$0xff] %vm54, 0.0
      %58 = vst.msk [vmem:[#allocation2 + $0x18] sm:$0xff] %vm54, 0.0
      %vm59 = vcmask 130048
      %60 = vst.msk [vmem:[#allocation3] sm:$0xff] %vm59, 0.0
      %61 = vst.msk [vmem:[#allocation3 + $0x8] sm:$0xff] %vm59, 0.0
      %62 = vst.msk [vmem:[#allocation3 + $0x10] sm:$0xff] %vm59, 0.0
      %63 = vst.msk [vmem:[#allocation3 + $0x18] sm:$0xff] %vm59, 0.0
      %64 = vst.msk [vmem:[#allocation4] sm:$0xff] %vm59, 0.0
      %65 = vst.msk [vmem:[#allocation4 + $0x8] sm:$0xff] %vm59, 0.0
      %66 = vst.msk [vmem:[#allocation4 + $0x10] sm:$0xff] %vm59, 0.0
      %67 = vst.msk [vmem:[#allocation4 + $0x18] sm:$0xff] %vm59, 0.0
      %68 = vst [vmem:[#allocation5] sm:$0xff] 0.0
    $region29: #{tpu_custom_call.1} parent=1 // pred_fallthru
      _
    %v69 = vld [vmem:[#allocation6] sm:$0xff]
    %v70 = vld [vmem:[#allocation9] sm:$0xff]
    %v71 = vld [vmem:[#allocation11] sm:$0xff]
    %v72 = vld [vmem:[#allocation2] sm:$0xff]
    %v73 = vld [vmem:[#allocation2 + $0x8] sm:$0xff]
    %v74 = vld [vmem:[#allocation2 + $0x10] sm:$0xff]
    %v75 = vld [vmem:[#allocation2 + $0x18] sm:$0xff]
    %76 = vxpose.xlu0.b32.start [1/16] %v70, 128
    %77 = vxpose.xlu0.b32.cont [2/16] 0.0, 128
    %78 = vxpose.xlu0.b32.cont [3/16] 0.0, 128
    %79 = vxpose.xlu0.b32.cont [4/16] 0.0, 128
    %80 = vxpose.xlu0.b32.cont [5/16] 0.0, 128
    %81 = vxpose.xlu0.b32.cont [6/16] 0.0, 128
    %82 = vxpose.xlu0.b32.cont [7/16] 0.0, 128
    %83 = vxpose.xlu0.b32.cont [8/16] 0.0, 128
    %84 = vxpose.xlu0.b32.cont [9/16] 0.0, 128
    %85 = vxpose.xlu0.b32.cont [10/16] 0.0, 128
    %86 = vxpose.xlu0.b32.cont [11/16] 0.0, 128
    %87 = vxpose.xlu0.b32.cont [12/16] 0.0, 128
    %88 = vxpose.xlu0.b32.cont [13/16] 0.0, 128
    %89 = vxpose.xlu0.b32.cont [14/16] 0.0, 128
    %90 = vxpose.xlu0.b32.cont [15/16] 0.0, 128
    %91 = vxpose.xlu0.b32.end [16/16] 0.0, 128
    %v92 = vpop.trf.xlu0
    %v93 = vpop.trf.xlu0
    %v94 = vpop.trf.xlu0
    %v95 = vpop.trf.xlu0
    %v96 = vpop.trf.xlu0
    %v97 = vpop.trf.xlu0
    %v98 = vpop.trf.xlu0
    %v99 = vpop.trf.xlu0
    %v100 = vpop.trf.xlu0
    %v101 = vpop.trf.xlu0
    %v102 = vpop.trf.xlu0
    %v103 = vpop.trf.xlu0
    %v104 = vpop.trf.xlu0
    %v105 = vpop.trf.xlu0
    %v106 = vpop.trf.xlu0
    %v107 = vpop.trf.xlu0
    %vm108 = vcmask 64512
    %v110 = vsel %vm108, %v92, 0
    %v113 = vsel %vm108, %v93, 0
    %v116 = vsel %vm108, %v94, 0
    %v119 = vsel %vm108, %v95, 0
    %121 = vmatprep.subr.mxu0 0.0
    %122 = vmatpush1.msra.mxu0 0.0
    %123 = vmatprep.subr.mxu0 0.0
    %124 = vmatpush1.msra.mxu0 0.0
    %125 = vmatprep.subr.mxu0 0.0
    %126 = vmatpush1.msra.mxu0 0.0
    %127 = vmatprep.subr.mxu0 0.0
    %128 = vmatpush1.msra.mxu0 0.0
    %129 = vmatprep.subr.mxu0 0.0
    %130 = vmatpush1.msra.mxu0 0.0
    %131 = vmatprep.subr.mxu0 0.0
    %132 = vmatpush1.msra.mxu0 0.0
    %133 = vmatprep.subr.mxu0 0.0
    %134 = vmatpush1.msra.mxu0 0.0
    %135 = vmatprep.subr.mxu0 0.0
    %136 = vmatpush1.msra.mxu0 0.0
    %137 = vmatprep.subr.mxu0 0.0
    %138 = vmatpush1.msra.mxu0 0.0
    %139 = vmatprep.subr.mxu0 0.0
    %140 = vmatpush1.msra.mxu0 0.0
    %141 = vmatprep.subr.mxu0 0.0
    %142 = vmatpush1.msra.mxu0 0.0
    %143 = vmatprep.subr.mxu0 0.0
    %144 = vmatpush1.msra.mxu0 0.0
    %145 = vmatprep.subr.mxu0 0.0
    %146 = vmatpush1.msra.mxu0 0.0
    %147 = vmatprep.subr.mxu0 0.0
    %148 = vmatpush1.msra.mxu0 0.0
    %149 = vmatprep.subr.mxu0 0.0
    %150 = vmatpush1.msra.mxu0 0.0
    %151 = vmatprep.subr.mxu0 0.0
    %152 = vmatpush1.msra.mxu0 %v70
    %153 = vmatprep.subr.mxu0 0.0
    %154 = vmatpush2.msra.mxu0 0.0
    %155 = vmatprep.subr.mxu0 0.0
    %156 = vmatpush2.msra.mxu0 0.0
    %157 = vmatprep.subr.mxu0 0.0
    %158 = vmatpush2.msra.mxu0 0.0
    %159 = vmatprep.subr.mxu0 0.0
    %160 = vmatpush2.msra.mxu0 0.0
    %161 = vmatprep.subr.mxu0 0.0
    %162 = vmatpush2.msra.mxu0 0.0
    %163 = vmatprep.subr.mxu0 0.0
    %164 = vmatpush2.msra.mxu0 0.0
    %165 = vmatprep.subr.mxu0 0.0
    %166 = vmatpush2.msra.mxu0 0.0
    %167 = vmatprep.subr.mxu0 0.0
    %168 = vmatpush2.msra.mxu0 0.0
    %169 = vmatprep.subr.mxu0 0.0
    %170 = vmatpush2.msra.mxu0 0.0
    %171 = vmatprep.subr.mxu0 0.0
    %172 = vmatpush2.msra.mxu0 0.0
    %173 = vmatprep.subr.mxu0 0.0
    %174 = vmatpush2.msra.mxu0 0.0
    %175 = vmatprep.subr.mxu0 0.0
    %176 = vmatpush2.msra.mxu0 0.0
    %177 = vmatprep.subr.mxu0 0.0
    %178 = vmatpush2.msra.mxu0 0.0
    %179 = vmatprep.subr.mxu0 0.0
    %180 = vmatpush2.msra.mxu0 0.0
    %181 = vmatprep.subr.mxu0 0.0
    %182 = vmatpush2.msra.mxu0 0.0
    %183 = vmatprep.subr.mxu0 0.0
    %184 = vmatpush2.msra.mxu0 0.0
    %185 = vmatprep.mubr.f32.mxu0 0.0
    %186 = vmatmul.mubr.f32.gmra.mxu0 %v110
    %v187 = vpop.f32.mrf.mxu0
    %v188 = vadd.f32 0.0, %v187
    %v189 = vpop.f32.mrf.mxu0
    %190 = vmatprep.mubr.f32.mxu0 0.0
    %191 = vmatmul.mubr.f32.gmra.mxu0 %v113
    %v192 = vpop.f32.mrf.mxu0
    %v193 = vadd.f32 0.0, %v192
    %v194 = vpop.f32.mrf.mxu0
    %195 = vmatprep.mubr.f32.mxu0 0.0
    %196 = vmatmul.mubr.f32.gmra.mxu0 %v116
    %v197 = vpop.f32.mrf.mxu0
    %v198 = vadd.f32 0.0, %v197
    %v199 = vpop.f32.mrf.mxu0
    %200 = vmatprep.mubr.f32.mxu0 0.0
    %201 = vmatmul.mubr.f32.gmra.mxu0 %v119
    %v202 = vpop.f32.mrf.mxu0
    %v203 = vadd.f32 0.0, %v202
    %v204 = vpop.f32.mrf.mxu0
    %205 = vdwg.mxu0
    %206 = vxpose.xlu0.b32.start [1/16] %v69, 128
    %207 = vxpose.xlu0.b32.cont [2/16] 0.0, 128
    %208 = vxpose.xlu0.b32.cont [3/16] 0.0, 128
    %209 = vxpose.xlu0.b32.cont [4/16] 0.0, 128
    %210 = vxpose.xlu0.b32.cont [5/16] 0.0, 128
    %211 = vxpose.xlu0.b32.cont [6/16] 0.0, 128
    %212 = vxpose.xlu0.b32.cont [7/16] 0.0, 128
    %213 = vxpose.xlu0.b32.cont [8/16] 0.0, 128
    %214 = vxpose.xlu0.b32.cont [9/16] 0.0, 128
    %215 = vxpose.xlu0.b32.cont [10/16] 0.0, 128
    %216 = vxpose.xlu0.b32.cont [11/16] 0.0, 128
    %217 = vxpose.xlu0.b32.cont [12/16] 0.0, 128
    %218 = vxpose.xlu0.b32.cont [13/16] 0.0, 128
    %219 = vxpose.xlu0.b32.cont [14/16] 0.0, 128
    %220 = vxpose.xlu0.b32.cont [15/16] 0.0, 128
    %221 = vxpose.xlu0.b32.end [16/16] 0.0, 128
    %v222 = vpop.trf.xlu0
    %v223 = vpop.trf.xlu0
    %v224 = vpop.trf.xlu0
    %v225 = vpop.trf.xlu0
    %v226 = vpop.trf.xlu0
    %v227 = vpop.trf.xlu0
    %v228 = vpop.trf.xlu0
    %v229 = vpop.trf.xlu0
    %v230 = vpop.trf.xlu0
    %v231 = vpop.trf.xlu0
    %v232 = vpop.trf.xlu0
    %v233 = vpop.trf.xlu0
    %v234 = vpop.trf.xlu0
    %v235 = vpop.trf.xlu0
    %v236 = vpop.trf.xlu0
    %v237 = vpop.trf.xlu0
    %v239 = vsel %vm108, %v222, 0
    %v242 = vsel %vm108, %v223, 0
    %v245 = vsel %vm108, %v224, 0
    %v248 = vsel %vm108, %v225, 0
    %250 = vmatprep.subr.mxu0 0.0
    %251 = vmatpush1.msra.mxu0 0.0
    %252 = vmatprep.subr.mxu0 0.0
    %253 = vmatpush1.msra.mxu0 0.0
    %254 = vmatprep.subr.mxu0 0.0
    %255 = vmatpush1.msra.mxu0 0.0
    %256 = vmatprep.subr.mxu0 0.0
    %257 = vmatpush1.msra.mxu0 0.0
    %258 = vmatprep.subr.mxu0 0.0
    %259 = vmatpush1.msra.mxu0 0.0
    %260 = vmatprep.subr.mxu0 0.0
    %261 = vmatpush1.msra.mxu0 0.0
    %262 = vmatprep.subr.mxu0 0.0
    %263 = vmatpush1.msra.mxu0 0.0
    %264 = vmatprep.subr.mxu0 0.0
    %265 = vmatpush1.msra.mxu0 0.0
    %266 = vmatprep.subr.mxu0 0.0
    %267 = vmatpush1.msra.mxu0 0.0
    %268 = vmatprep.subr.mxu0 0.0
    %269 = vmatpush1.msra.mxu0 0.0
    %270 = vmatprep.subr.mxu0 0.0
    %271 = vmatpush1.msra.mxu0 0.0
    %272 = vmatprep.subr.mxu0 0.0
    %273 = vmatpush1.msra.mxu0 0.0
    %274 = vmatprep.subr.mxu0 0.0
    %275 = vmatpush1.msra.mxu0 0.0
    %276 = vmatprep.subr.mxu0 0.0
    %277 = vmatpush1.msra.mxu0 0.0
    %278 = vmatprep.subr.mxu0 0.0
    %279 = vmatpush1.msra.mxu0 0.0
    %280 = vmatprep.subr.mxu0 0.0
    %281 = vmatpush1.msra.mxu0 %v69
    %282 = vmatprep.subr.mxu0 0.0
    %283 = vmatpush2.msra.mxu0 0.0
    %284 = vmatprep.subr.mxu0 0.0
    %285 = vmatpush2.msra.mxu0 0.0
    %286 = vmatprep.subr.mxu0 0.0
    %287 = vmatpush2.msra.mxu0 0.0
    %288 = vmatprep.subr.mxu0 0.0
    %289 = vmatpush2.msra.mxu0 0.0
    %290 = vmatprep.subr.mxu0 0.0
    %291 = vmatpush2.msra.mxu0 0.0
    %292 = vmatprep.subr.mxu0 0.0
    %293 = vmatpush2.msra.mxu0 0.0
    %294 = vmatprep.subr.mxu0 0.0
    %295 = vmatpush2.msra.mxu0 0.0
    %296 = vmatprep.subr.mxu0 0.0
    %297 = vmatpush2.msra.mxu0 0.0
    %298 = vmatprep.subr.mxu0 0.0
    %299 = vmatpush2.msra.mxu0 0.0
    %300 = vmatprep.subr.mxu0 0.0
    %301 = vmatpush2.msra.mxu0 0.0
    %302 = vmatprep.subr.mxu0 0.0
    %303 = vmatpush2.msra.mxu0 0.0
    %304 = vmatprep.subr.mxu0 0.0
    %305 = vmatpush2.msra.mxu0 0.0
    %306 = vmatprep.subr.mxu0 0.0
    %307 = vmatpush2.msra.mxu0 0.0
    %308 = vmatprep.subr.mxu0 0.0
    %309 = vmatpush2.msra.mxu0 0.0
    %310 = vmatprep.subr.mxu0 0.0
    %311 = vmatpush2.msra.mxu0 0.0
    %312 = vmatprep.subr.mxu0 0.0
    %313 = vmatpush2.msra.mxu0 0.0
    %314 = vmatprep.mubr.f32.mxu0 0.0
    %315 = vmatmul.mubr.f32.gmra.mxu0 %v239
    %v316 = vpop.f32.mrf.mxu0
    %v317 = vadd.f32 %v188, %v316
    %v318 = vpop.f32.mrf.mxu0
    %319 = vmatprep.mubr.f32.mxu0 0.0
    %320 = vmatmul.mubr.f32.gmra.mxu0 %v242
    %v321 = vpop.f32.mrf.mxu0
    %v322 = vadd.f32 %v193, %v321
    %v323 = vpop.f32.mrf.mxu0
    %324 = vmatprep.mubr.f32.mxu0 0.0
    %325 = vmatmul.mubr.f32.gmra.mxu0 %v245
    %v326 = vpop.f32.mrf.mxu0
    %v327 = vadd.f32 %v198, %v326
    %v328 = vpop.f32.mrf.mxu0
    %329 = vmatprep.mubr.f32.mxu0 0.0
    %330 = vmatmul.mubr.f32.gmra.mxu0 %v248
    %v331 = vpop.f32.mrf.mxu0
    %v332 = vadd.f32 %v203, %v331
    %v333 = vpop.f32.mrf.mxu0
    %334 = vdwg.mxu0
    %v335 = vadd.f32 %v72, %v317
    %v336 = vadd.f32 %v73, %v322
    %v337 = vadd.f32 %v74, %v327
    %v338 = vadd.f32 %v75, %v332
    %vm339 = vcmask 261120
    %340 = vst.msk [vmem:[#allocation2] sm:$0xff] %vm339, %v335
    %341 = vst.msk [vmem:[#allocation2 + $0x8] sm:$0xff] %vm339, %v336
    %342 = vst.msk [vmem:[#allocation2 + $0x10] sm:$0xff] %vm339, %v337
    %343 = vst.msk [vmem:[#allocation2 + $0x18] sm:$0xff] %vm339, %v338
    %v344 = vld [vmem:[#allocation3] sm:$0xff]
    %v345 = vld [vmem:[#allocation3 + $0x8] sm:$0xff]
    %v346 = vld [vmem:[#allocation3 + $0x10] sm:$0xff]
    %v347 = vld [vmem:[#allocation3 + $0x18] sm:$0xff]
    %348 = vmatprep.subr.mxu0 0.0
    %349 = vmatpush1.msra.mxu0 0.0
    %350 = vmatprep.subr.mxu0 0.0
    %351 = vmatpush1.msra.mxu0 0.0
    %352 = vmatprep.subr.mxu0 0.0
    %353 = vmatpush1.msra.mxu0 0.0
    %354 = vmatprep.subr.mxu0 0.0
    %355 = vmatpush1.msra.mxu0 0.0
    %356 = vmatprep.subr.mxu0 0.0
    %357 = vmatpush1.msra.mxu0 0.0
    %358 = vmatprep.subr.mxu0 0.0
    %359 = vmatpush1.msra.mxu0 0.0
    %360 = vmatprep.subr.mxu0 0.0
    %361 = vmatpush1.msra.mxu0 0.0
    %362 = vmatprep.subr.mxu0 0.0
    %363 = vmatpush1.msra.mxu0 0.0
    %364 = vmatprep.subr.mxu0 0.0
    %365 = vmatpush1.msra.mxu0 0.0
    %366 = vmatprep.subr.mxu0 0.0
    %367 = vmatpush1.msra.mxu0 0.0
    %368 = vmatprep.subr.mxu0 0.0
    %369 = vmatpush1.msra.mxu0 0.0
    %370 = vmatprep.subr.mxu0 0.0
    %371 = vmatpush1.msra.mxu0 0.0
    %372 = vmatprep.subr.mxu0 0.0
    %373 = vmatpush1.msra.mxu0 0.0
    %374 = vmatprep.subr.mxu0 0.0
    %375 = vmatpush1.msra.mxu0 0.0
    %376 = vmatprep.subr.mxu0 0.0
    %377 = vmatpush1.msra.mxu0 0.0
    %378 = vmatprep.subr.mxu0 0.0
    %379 = vmatpush1.msra.mxu0 %v71
    %380 = vmatprep.subr.mxu0 0.0
    %381 = vmatpush2.msra.mxu0 0.0
    %382 = vmatprep.subr.mxu0 0.0
    %383 = vmatpush2.msra.mxu0 0.0
    %384 = vmatprep.subr.mxu0 0.0
    %385 = vmatpush2.msra.mxu0 0.0
    %386 = vmatprep.subr.mxu0 0.0
    %387 = vmatpush2.msra.mxu0 0.0
    %388 = vmatprep.subr.mxu0 0.0
    %389 = vmatpush2.msra.mxu0 0.0
    %390 = vmatprep.subr.mxu0 0.0
    %391 = vmatpush2.msra.mxu0 0.0
    %392 = vmatprep.subr.mxu0 0.0
    %393 = vmatpush2.msra.mxu0 0.0
    %394 = vmatprep.subr.mxu0 0.0
    %395 = vmatpush2.msra.mxu0 0.0
    %396 = vmatprep.subr.mxu0 0.0
    %397 = vmatpush2.msra.mxu0 0.0
    %398 = vmatprep.subr.mxu0 0.0
    %399 = vmatpush2.msra.mxu0 0.0
    %400 = vmatprep.subr.mxu0 0.0
    %401 = vmatpush2.msra.mxu0 0.0
    %402 = vmatprep.subr.mxu0 0.0
    %403 = vmatpush2.msra.mxu0 0.0
    %404 = vmatprep.subr.mxu0 0.0
    %405 = vmatpush2.msra.mxu0 0.0
    %406 = vmatprep.subr.mxu0 0.0
    %407 = vmatpush2.msra.mxu0 0.0
    %408 = vmatprep.subr.mxu0 0.0
    %409 = vmatpush2.msra.mxu0 0.0
    %410 = vmatprep.subr.mxu0 0.0
    %411 = vmatpush2.msra.mxu0 0.0
    %412 = vmatprep.mubr.f32.mxu0 0.0
    %413 = vmatmul.mubr.f32.gmra.mxu0 %v239
    %v414 = vpop.f32.mrf.mxu0
    %v415 = vadd.f32 0.0, %v414
    %v416 = vpop.f32.mrf.mxu0
    %417 = vmatprep.mubr.f32.mxu0 0.0
    %418 = vmatmul.mubr.f32.gmra.mxu0 %v242
    %v419 = vpop.f32.mrf.mxu0
    %v420 = vadd.f32 0.0, %v419
    %v421 = vpop.f32.mrf.mxu0
    %422 = vmatprep.mubr.f32.mxu0 0.0
    %423 = vmatmul.mubr.f32.gmra.mxu0 %v245
    %v424 = vpop.f32.mrf.mxu0
    %v425 = vadd.f32 0.0, %v424
    %v426 = vpop.f32.mrf.mxu0
    %427 = vmatprep.mubr.f32.mxu0 0.0
    %428 = vmatmul.mubr.f32.gmra.mxu0 %v248
    %v429 = vpop.f32.mrf.mxu0
    %v430 = vadd.f32 0.0, %v429
    %v431 = vpop.f32.mrf.mxu0
    %432 = vdwg.mxu0
    %v433 = vadd.f32 %v344, %v415
    %v434 = vadd.f32 %v345, %v420
    %v435 = vadd.f32 %v346, %v425
    %v436 = vadd.f32 %v347, %v430
    %vm437 = vcmask 130048
    %438 = vst.msk [vmem:[#allocation3] sm:$0xff] %vm437, %v433
    %439 = vst.msk [vmem:[#allocation3 + $0x8] sm:$0xff] %vm437, %v434
    %440 = vst.msk [vmem:[#allocation3 + $0x10] sm:$0xff] %vm437, %v435
    %441 = vst.msk [vmem:[#allocation3 + $0x18] sm:$0xff] %vm437, %v436
    %v442 = vld [vmem:[#allocation4] sm:$0xff]
    %v443 = vld [vmem:[#allocation4 + $0x8] sm:$0xff]
    %v444 = vld [vmem:[#allocation4 + $0x10] sm:$0xff]
    %v445 = vld [vmem:[#allocation4 + $0x18] sm:$0xff]
    %446 = vmatprep.subr.mxu0 0.0
    %447 = vmatpush1.msra.mxu0 0.0
    %448 = vmatprep.subr.mxu0 0.0
    %449 = vmatpush1.msra.mxu0 0.0
    %450 = vmatprep.subr.mxu0 0.0
    %451 = vmatpush1.msra.mxu0 0.0
    %452 = vmatprep.subr.mxu0 0.0
    %453 = vmatpush1.msra.mxu0 0.0
    %454 = vmatprep.subr.mxu0 0.0
    %455 = vmatpush1.msra.mxu0 0.0
    %456 = vmatprep.subr.mxu0 0.0
    %457 = vmatpush1.msra.mxu0 0.0
    %458 = vmatprep.subr.mxu0 0.0
    %459 = vmatpush1.msra.mxu0 0.0
    %460 = vmatprep.subr.mxu0 0.0
    %461 = vmatpush1.msra.mxu0 0.0
    %462 = vmatprep.subr.mxu0 0.0
    %463 = vmatpush1.msra.mxu0 0.0
    %464 = vmatprep.subr.mxu0 0.0
    %465 = vmatpush1.msra.mxu0 0.0
    %466 = vmatprep.subr.mxu0 0.0
    %467 = vmatpush1.msra.mxu0 0.0
    %468 = vmatprep.subr.mxu0 0.0
    %469 = vmatpush1.msra.mxu0 0.0
    %470 = vmatprep.subr.mxu0 0.0
    %471 = vmatpush1.msra.mxu0 0.0
    %472 = vmatprep.subr.mxu0 0.0
    %473 = vmatpush1.msra.mxu0 0.0
    %474 = vmatprep.subr.mxu0 0.0
    %475 = vmatpush1.msra.mxu0 0.0
    %476 = vmatprep.subr.mxu0 0.0
    %477 = vmatpush1.msra.mxu0 %v71
    %478 = vmatprep.subr.mxu0 0.0
    %479 = vmatpush2.msra.mxu0 0.0
    %480 = vmatprep.subr.mxu0 0.0
    %481 = vmatpush2.msra.mxu0 0.0
    %482 = vmatprep.subr.mxu0 0.0
    %483 = vmatpush2.msra.mxu0 0.0
    %484 = vmatprep.subr.mxu0 0.0
    %485 = vmatpush2.msra.mxu0 0.0
    %486 = vmatprep.subr.mxu0 0.0
    %487 = vmatpush2.msra.mxu0 0.0
    %488 = vmatprep.subr.mxu0 0.0
    %489 = vmatpush2.msra.mxu0 0.0
    %490 = vmatprep.subr.mxu0 0.0
    %491 = vmatpush2.msra.mxu0 0.0
    %492 = vmatprep.subr.mxu0 0.0
    %493 = vmatpush2.msra.mxu0 0.0
    %494 = vmatprep.subr.mxu0 0.0
    %495 = vmatpush2.msra.mxu0 0.0
    %496 = vmatprep.subr.mxu0 0.0
    %497 = vmatpush2.msra.mxu0 0.0
    %498 = vmatprep.subr.mxu0 0.0
    %499 = vmatpush2.msra.mxu0 0.0
    %500 = vmatprep.subr.mxu0 0.0
    %501 = vmatpush2.msra.mxu0 0.0
    %502 = vmatprep.subr.mxu0 0.0
    %503 = vmatpush2.msra.mxu0 0.0
    %504 = vmatprep.subr.mxu0 0.0
    %505 = vmatpush2.msra.mxu0 0.0
    %506 = vmatprep.subr.mxu0 0.0
    %507 = vmatpush2.msra.mxu0 0.0
    %508 = vmatprep.subr.mxu0 0.0
    %509 = vmatpush2.msra.mxu0 0.0
    %510 = vmatprep.mubr.f32.mxu0 0.0
    %511 = vmatmul.mubr.f32.gmra.mxu0 %v110
    %v512 = vpop.f32.mrf.mxu0
    %v513 = vadd.f32 0.0, %v512
    %v514 = vpop.f32.mrf.mxu0
    %515 = vmatprep.mubr.f32.mxu0 0.0
    %516 = vmatmul.mubr.f32.gmra.mxu0 %v113
    %v517 = vpop.f32.mrf.mxu0
    %v518 = vadd.f32 0.0, %v517
    %v519 = vpop.f32.mrf.mxu0
    %520 = vmatprep.mubr.f32.mxu0 0.0
    %521 = vmatmul.mubr.f32.gmra.mxu0 %v116
    %v522 = vpop.f32.mrf.mxu0
    %v523 = vadd.f32 0.0, %v522
    %v524 = vpop.f32.mrf.mxu0
    %525 = vmatprep.mubr.f32.mxu0 0.0
    %526 = vmatmul.mubr.f32.gmra.mxu0 %v119
    %v527 = vpop.f32.mrf.mxu0
    %v528 = vadd.f32 0.0, %v527
    %v529 = vpop.f32.mrf.mxu0
    %530 = vdwg.mxu0
    %v531 = vadd.f32 %v442, %v513
    %v532 = vadd.f32 %v443, %v518
    %v533 = vadd.f32 %v444, %v523
    %v534 = vadd.f32 %v445, %v528
    %535 = vst.msk [vmem:[#allocation4] sm:$0xff] %vm437, %v531
    %536 = vst.msk [vmem:[#allocation4 + $0x8] sm:$0xff] %vm437, %v532
    %537 = vst.msk [vmem:[#allocation4 + $0x10] sm:$0xff] %vm437, %v533
    %538 = vst.msk [vmem:[#allocation4 + $0x18] sm:$0xff] %vm437, %v534
    %v539 = vmul.f32 %v69, %v69
    %v540 = vsel %vm339, %v539, 0.0
    %541 = vadd.xlane.f32.xlu0 %v540
    %v542 = vpop.xlane.xlu0 %541
    %v543 = vmul.f32 %v70, %v70
    %v544 = vsel %vm339, %v543, 0.0
    %545 = vadd.xlane.f32.xlu0 %v544
    %v546 = vpop.xlane.xlu0 %545
    %v547 = vmul.f32 %v69, %v70
    %v548 = vsel %vm339, %v547, 0.0
    %549 = vadd.xlane.f32.xlu0 %v548
    %v550 = vpop.xlane.xlu0 %549
    %v551 = vmul.f32 %v71, %v71
    %v552 = vsel %vm437, %v551, 0.0
    %553 = vadd.xlane.f32.xlu0 %v552
    %v554 = vpop.xlane.xlu0 %553
    %vm555 = vcmask 7168
    %v556 = vsel %vm555, %v550, 0.0
    %557 = vadd.xlane.f32.xlu0 %v556
    %v558 = vpop.xlane.xlu0 %557
    %v559 = vrot.slane %v558, 4
    %v560 = vadd.f32 %v558, %v559
    %v561 = vrot.slane %v560, 2
    %v562 = vadd.f32 %v560, %v561
    %v563 = vrot.slane %v562, 1
    %v564 = vadd.f32 %v562, %v563
    %s565 = vtos %v564
    %v566 = vadd.f32 %v542, %v550
    %v567 = vadd.f32 %v566, %v546
    %v568 = vmul.f32 %v567, %v554
    %v569 = vsel %vm555, %v568, 0.0
    %570 = vadd.xlane.f32.xlu0 %v569
    %v571 = vpop.xlane.xlu0 %570
    %v572 = vrot.slane %v571, 4
    %v573 = vadd.f32 %v571, %v572
    %v574 = vrot.slane %v573, 2
    %v575 = vadd.f32 %v573, %v574
    %v576 = vrot.slane %v575, 1
    %v577 = vadd.f32 %v575, %v576
    %s578 = vtos %v577
    %v579 = vmul.f32 %v542, %v542
    %v580 = vmul.f32 %v546, %v546
    %v581 = vadd.f32 %v579, %v580
    %v582 = vsel %vm555, %v581, 0.0
    %583 = vadd.xlane.f32.xlu0 %v582
    %v584 = vpop.xlane.xlu0 %583
    %v585 = vrot.slane %v584, 4
    %v586 = vadd.f32 %v584, %v585
    %v587 = vrot.slane %v586, 2
    %v588 = vadd.f32 %v586, %v587
    %v589 = vrot.slane %v588, 1
    %v590 = vadd.f32 %v588, %v589
    %s591 = vtos %v590
    %v592 = vlaneseq
    %v593 = vshrl.u32 %v592, 7
    %vm594 = vcmp.eq.s32.totalorder %v593, 0
    %vm595 = vcmp.eq.s32.totalorder %v593, 1
    %vm596 = vcmp.eq.s32.totalorder %v593, 2
    %v597 = vstv %s591
    %v598 = vsel %vm596, %v597, 0.0
    %v599 = vstv %s578
    %v600 = vsel %vm595, %v599, %v598
    %v601 = vstv %s565
    %v602 = vsel %vm594, %v601, %v600
    %v603 = vld [vmem:[#allocation5] sm:$0xff]
    %v604 = vadd.f32 %v603, %v602
    %605 = vst [vmem:[#allocation5] sm:$0xff] %v604
    // Predicated region
    $region30: #{tpu_custom_call.1} parent=1 // pred_check
      %p606 = pneg %p50
    $region31: #{tpu_custom_call.1} parent=1 // pred_check_branch
      %608 = sbr.rel (%p606) target = $region33
    $region32: #{tpu_custom_call.1} parent=1 // pred_region
      %v609 = vld [vmem:[#allocation2] sm:$0xff]
      %v610 = vld [vmem:[#allocation2 + $0x8] sm:$0xff]
      %v611 = vld [vmem:[#allocation2 + $0x10] sm:$0xff]
      %v612 = vld [vmem:[#allocation2 + $0x18] sm:$0xff]
      %v613 = vld [vmem:[#allocation3] sm:$0xff]
      %v614 = vld [vmem:[#allocation3 + $0x8] sm:$0xff]
      %v615 = vld [vmem:[#allocation3 + $0x10] sm:$0xff]
      %v616 = vld [vmem:[#allocation3 + $0x18] sm:$0xff]
      %v617 = vld [vmem:[#allocation4] sm:$0xff]
      %v618 = vld [vmem:[#allocation4 + $0x8] sm:$0xff]
      %v619 = vld [vmem:[#allocation4 + $0x10] sm:$0xff]
      %v620 = vld [vmem:[#allocation4 + $0x18] sm:$0xff]
      %v621 = vmul.f32 %v613, %v613
      %v622 = vmul.f32 %v614, %v614
      %v623 = vmul.f32 %v615, %v615
      %v624 = vmul.f32 %v616, %v616
      %v625 = vsel %vm437, %v621, 0.0
      %v626 = vsel %vm437, %v622, 0.0
      %v627 = vadd.f32 %v625, %v626
      %v628 = vsel %vm437, %v623, 0.0
      %v629 = vadd.f32 %v627, %v628
      %v630 = vsel %vm437, %v624, 0.0
      %v631 = vadd.f32 %v629, %v630
      %632 = vadd.xlane.f32.xlu0 %v631
      %v633 = vpop.xlane.xlu0 %632
      %v634 = vrot.slane %v633, 4
      %v635 = vadd.f32 %v633, %v634
      %v636 = vrot.slane %v635, 2
      %v637 = vadd.f32 %v635, %v636
      %v638 = vrot.slane %v637, 1
      %v639 = vadd.f32 %v637, %v638
      %s640 = vtos %v639
      %v641 = vmul.f32 %v617, %v617
      %v642 = vmul.f32 %v618, %v618
      %v643 = vmul.f32 %v619, %v619
      %v644 = vmul.f32 %v620, %v620
      %v645 = vsel %vm437, %v641, 0.0
      %v646 = vsel %vm437, %v642, 0.0
      %v647 = vadd.f32 %v645, %v646
      %v648 = vsel %vm437, %v643, 0.0
      %v649 = vadd.f32 %v647, %v648
      %v650 = vsel %vm437, %v644, 0.0
      %v651 = vadd.f32 %v649, %v650
      %652 = vadd.xlane.f32.xlu0 %v651
      %v653 = vpop.xlane.xlu0 %652
      %v654 = vrot.slane %v653, 4
      %v655 = vadd.f32 %v653, %v654
      %v656 = vrot.slane %v655, 2
      %v657 = vadd.f32 %v655, %v656
      %v658 = vrot.slane %v657, 1
      %v659 = vadd.f32 %v657, %v658
      %s660 = vtos %v659
      %s661 = sadd.f32 %s640, %s660
      %v662 = vmul.f32 %v613, %v617
      %v663 = vmul.f32 %v614, %v618
      %v664 = vmul.f32 %v615, %v619
      %v665 = vmul.f32 %v616, %v620
      %v666 = vsel %vm437, %v662, 0.0
      %v667 = vsel %vm437, %v663, 0.0
      %v668 = vadd.f32 %v666, %v667
      %v669 = vsel %vm437, %v664, 0.0
      %v670 = vadd.f32 %v668, %v669
      %v671 = vsel %vm437, %v665, 0.0
      %v672 = vadd.f32 %v670, %v671
      %673 = vadd.xlane.f32.xlu0 %v672
      %v674 = vpop.xlane.xlu0 %673
      %v675 = vrot.slane %v674, 4
      %v676 = vadd.f32 %v674, %v675
      %v677 = vrot.slane %v676, 2
      %v678 = vadd.f32 %v676, %v677
      %v679 = vrot.slane %v678, 1
      %v680 = vadd.f32 %v678, %v679
      %s681 = vtos %v680
      %s682 = sadd.f32 %s661, %s681
      %v683 = vmul.f32 %v609, %v609
      %v684 = vmul.f32 %v610, %v610
      %v685 = vmul.f32 %v611, %v611
      %v686 = vmul.f32 %v612, %v612
      %v687 = vsel %vm339, %v683, 0.0
      %v688 = vsel %vm339, %v684, 0.0
      %v689 = vadd.f32 %v687, %v688
      %v690 = vsel %vm339, %v685, 0.0
      %v691 = vadd.f32 %v689, %v690
      %v692 = vsel %vm339, %v686, 0.0
      %v693 = vadd.f32 %v691, %v692
      %694 = vadd.xlane.f32.xlu0 %v693
      %v695 = vpop.xlane.xlu0 %694
      %v696 = vrot.slane %v695, 4
      %v697 = vadd.f32 %v695, %v696
      %v698 = vrot.slane %v697, 2
      %v699 = vadd.f32 %v697, %v698
      %v700 = vrot.slane %v699, 1
      %v701 = vadd.f32 %v699, %v700
      %s702 = vtos %v701
      %v703 = vstv %s702
      %v704 = vsel %vm596, %v703, 0.0
      %v705 = vstv %s682
      %v706 = vsel %vm595, %v705, %v704
      %v707 = vsel %vm594, 1.0, -1.0
      %v708 = vld [vmem:[#allocation5] sm:$0xff]
      %v709 = vmul.f32 %v707, %v708
      %v710 = vadd.f32 %v706, %v709
      %711 = vst [vmem:[#allocation12] sm:$0xff] %v710
    $region33: #{tpu_custom_call.1} parent=1 // pred_fallthru
      _
    // Predicated region
    $region34: #{tpu_custom_call.1} parent=1 // pred_check
      _
    $region35: #{tpu_custom_call.1} parent=1 // pred_check_branch
      %713 = sbr.rel (0) target = $region37
    $region36: #{tpu_custom_call.1} parent=1 // pred_region
      %s715 = ssub.s32 128, 128
      %716 = vsyncadd [#allocation8], %s715
      %s718 = sshll.u32 [#allocation12], 4
      %s719 = int_to_ptr.vmem [resolvable:$true] %s718
      %721 = dma.vmem_to_hbm [thread:$0]  %s719, 128, %s3, [#allocation8]
    $region37: #{tpu_custom_call.1} parent=1 // pred_fallthru
      _
    // Predicated region
    $region38: #{tpu_custom_call.1} parent=1 // pred_check
      _
    $region39: #{tpu_custom_call.1} parent=1 // pred_check_branch
      %723 = sbr.rel (0) target = $region41
    $region40: #{tpu_custom_call.1} parent=1 // pred_region
      %724 = dma.done [#allocation8], 128
    $region41: #{tpu_custom_call.1} parent=1 // pred_fallthru
      _
    %725 = vsyncpa [#allocation7], 1
    %726 = vsyncpa [#allocation10], 1
    %727 = vsyncpa [#allocation8], 1

</llo_original>
